<compile_context>
chip_gen: v7x
topology: tpu7x:2x2x1
jax: 0.10.0
libtpu: 0.0.40
codegen_flags: <defaults>
</compile_context>

<pallas_src>
import contextlib
import math
from functools import partial

import jax
import jax.numpy as jnp
from jax.experimental import pallas as pl
from jax.experimental.pallas import tpu as pltpu

num_single_transformer_blocks = 38
num_transformer_blocks = 19

# ----------------------------------------------------------------------------
# Cache context (pure-python glue, mirrors nunchaku/caching/utils.py)
# ----------------------------------------------------------------------------
_current_cache_context = None


class CacheContext:
    def __init__(self):
        self._buffers = {}

    def get_buffer(self, name):
        return self._buffers.get(name)

    def set_buffer(self, name, buf):
        self._buffers[name] = buf


@contextlib.contextmanager
def cache_context(ctx):
    global _current_cache_context
    old = _current_cache_context
    _current_cache_context = ctx
    try:
        yield
    finally:
        _current_cache_context = old


def get_current_cache_context():
    return _current_cache_context


def get_buffer(name):
    ctx = get_current_cache_context()
    assert ctx is not None, "cache_context must be set before"
    return ctx.get_buffer(name)


def set_buffer(name, buffer):
    ctx = get_current_cache_context()
    assert ctx is not None, "cache_context must be set before"
    ctx.set_buffer(name, buffer)


# ----------------------------------------------------------------------------
# Pallas kernels
# ----------------------------------------------------------------------------
_VMEM = pl.BlockSpec(memory_space=pltpu.MemorySpace.VMEM)
_SMEM = pl.BlockSpec(memory_space=pltpu.MemorySpace.SMEM)


def _fused_layers_kernel(x_ref, temb_ref, wmod_ref, bmod_ref, wq_ref, wk_ref,
                         wv_ref, wo_ref, w1_ref, w2_ref, o_ref, carry_ref, *,
                         inv_sqrt_d):
    """One grid step == one synthetic Flux block.  The hidden state is carried
    across layers in a float32 VMEM scratch; weights are bf16 MXU operands."""
    layer = pl.program_id(0)

    @pl.when(layer == 0)
    def _():
        carry_ref[...] = x_ref[...].astype(jnp.float32)

    x = carry_ref[...]                                   # [S, D] f32 carry
    D = x.shape[-1]
    temb = temb_ref[...]                                 # [1, D] bf16

    # adaLN-style modulation from temb (bf16 x bf16 -> f32 accumulate)
    mod = jnp.dot(temb, wmod_ref[0], preferred_element_type=jnp.float32)
    mod = mod + bmod_ref[0].astype(jnp.float32)          # [1, 2D]
    shift = mod[:, :D]
    scale = mod[:, D:]
    xm = (x * (1.0 + scale) + shift).astype(jnp.bfloat16)

    # single-head self-attention over all (txt+img) tokens
    q = jnp.dot(xm, wq_ref[0], preferred_element_type=jnp.float32)
    k = jnp.dot(xm, wk_ref[0], preferred_element_type=jnp.float32)
    v = jnp.dot(xm, wv_ref[0], preferred_element_type=jnp.float32)
    # TODO(synk): the nunchaku packed rotary embeddings target its CUDA marlin
    # kernels; RoPE is not applied in this synthetic stand-in.
    s = jax.lax.dot_general(q.astype(jnp.bfloat16), k.astype(jnp.bfloat16),
                            (((1,), (1,)), ((), ())),
                            preferred_element_type=jnp.float32) * inv_sqrt_d
    s = s - jnp.max(s, axis=-1, keepdims=True)
    p = jnp.exp(s)
    p = p * pl.reciprocal(jnp.sum(p, axis=-1, keepdims=True), approx=True)
    attn = jnp.dot(p.astype(jnp.bfloat16), v.astype(jnp.bfloat16),
                   preferred_element_type=jnp.float32)
    y = x + jnp.dot(attn.astype(jnp.bfloat16), wo_ref[0],
                    preferred_element_type=jnp.float32)

    # GELU MLP with residual
    h = jnp.dot(y.astype(jnp.bfloat16), w1_ref[0],
                preferred_element_type=jnp.float32)
    h = jax.nn.gelu(h, approximate=True)
    out = y + jnp.dot(h.astype(jnp.bfloat16), w2_ref[0],
                      preferred_element_type=jnp.float32)

    carry_ref[...] = out
    o_ref[...] = out.astype(o_ref.dtype)                 # resident output block


def _add_kernel(a_ref, b_ref, o_ref):
    o_ref[...] = a_ref[...] + b_ref[...]


def _sub_kernel(a_ref, b_ref, o_ref):
    o_ref[...] = a_ref[...] - b_ref[...]


def _sub_similarity_kernel(new_ref, old_ref, prev_ref, res_ref, ratio_ref):
    """Fused: res = new - old ; ratio = sum|prev - res| / max(sum|prev|, eps)."""
    new = new_ref[...].astype(jnp.float32)
    old = old_ref[...].astype(jnp.float32)
    prev = prev_ref[...].astype(jnp.float32)
    res = new - old
    res_ref[...] = res.astype(res_ref.dtype)
    num = jnp.sum(jnp.abs(prev - res))
    den = jnp.sum(jnp.abs(prev))
    ratio_ref[0] = num / jnp.maximum(den, 1e-12)


def _abs_ratio_kernel(t1_ref, t2_ref, ratio_ref):
    t1 = t1_ref[...].astype(jnp.float32)
    t2 = t2_ref[...].astype(jnp.float32)
    num = jnp.sum(jnp.abs(t1 - t2))
    den = jnp.sum(jnp.abs(t1))
    ratio_ref[0] = num / jnp.maximum(den, 1e-12)


# ----------------------------------------------------------------------------
# Pallas wrappers
# ----------------------------------------------------------------------------
@partial(jax.jit, static_argnames=("start", "stop"))
def _run_layers_impl(x2d, temb2d, wmod, bmod, wq, wk, wv, wo, w1, w2, *,
                     start, stop):
    S, D = x2d.shape
    H = w1.shape[-1]
    L = stop - start

    def wmap(l):
        return (l + start, 0, 0)

    grid_spec = pltpu.PrefetchScalarGridSpec(
        num_scalar_prefetch=0,
        grid=(L,),
        in_specs=[
            pl.BlockSpec((S, D), lambda l: (0, 0)),          # x (loaded once)
            pl.BlockSpec((1, D), lambda l: (0, 0)),          # temb
            pl.BlockSpec((1, D, 2 * D), wmap),               # wmod
            pl.BlockSpec((1, 1, 2 * D), wmap),               # bmod
            pl.BlockSpec((1, D, D), wmap),                   # wq
            pl.BlockSpec((1, D, D), wmap),                   # wk
            pl.BlockSpec((1, D, D), wmap),                   # wv
            pl.BlockSpec((1, D, D), wmap),                   # wo
            pl.BlockSpec((1, D, H), wmap),                   # w1
            pl.BlockSpec((1, H, D), wmap),                   # w2
        ],
        out_specs=pl.BlockSpec((S, D), lambda l: (0, 0)),    # resident output
        scratch_shapes=[pltpu.VMEM((S, D), jnp.float32)],    # f32 layer carry
    )

    flops_per_layer = (2 * D * 2 * D            # modulation
                       + 3 * 2 * S * D * D      # q,k,v projections
                       + 2 * S * S * D          # q @ k^T
                       + 2 * S * S * D          # p @ v
                       + 2 * S * D * D          # attn @ wo
                       + 2 * S * D * H          # y @ w1
                       + 2 * S * H * D)         # h @ w2
    transcend_per_layer = S * S + S * H + S
    weight_bytes_per_layer = 2 * (2 * D * D + 2 * D + 4 * D * D + 2 * D * H)
    cost = pl.CostEstimate(
        flops=L * flops_per_layer,
        transcendentals=L * transcend_per_layer,
        bytes_accessed=L * weight_bytes_per_layer + 2 * (2 * S * D) + 2 * D,
    )

    kernel = partial(_fused_layers_kernel, inv_sqrt_d=1.0 / math.sqrt(D))
    # TODO(synk): for production Flux shapes (D=3072, S in the thousands) add a
    # token-tile grid axis (flash-style attention, 'parallel' for v7x's 2 TCs)
    # and size tiles against the 64 MiB v7x VMEM.
    return pl.pallas_call(
        kernel,
        out_shape=jax.ShapeDtypeStruct((S, D), x2d.dtype),
        grid_spec=grid_spec,
        compiler_params=pltpu.CompilerParams(
            dimension_semantics=("arbitrary",)),
        cost_estimate=cost,
    )(x2d, temb2d, wmod, bmod, wq, wk, wv, wo, w1, w2)


def run_layers(x2d, temb2d, w, start, stop):
    """x2d: [S, D] bf16, temb2d: [1, D] bf16, w: dict of stacked [L,...] weights."""
    return _run_layers_impl(x2d, temb2d, w["wmod"], w["bmod"], w["wq"], w["wk"],
                            w["wv"], w["wo"], w["w1"], w["w2"],
                            start=start, stop=stop)


@jax.jit
def residual_add(a, b):
    shape = a.shape
    a2 = a.reshape(-1, shape[-1])
    b2 = b.reshape(-1, shape[-1])
    out = pl.pallas_call(
        _add_kernel,
        out_shape=jax.ShapeDtypeStruct(a2.shape, a2.dtype),
        in_specs=[_VMEM, _VMEM],
        out_specs=_VMEM,
    )(a2, b2)
    return out.reshape(shape)


@jax.jit
def residual_sub(a, b):
    shape = a.shape
    a2 = a.reshape(-1, shape[-1])
    b2 = b.reshape(-1, shape[-1])
    out = pl.pallas_call(
        _sub_kernel,
        out_shape=jax.ShapeDtypeStruct(a2.shape, a2.dtype),
        in_specs=[_VMEM, _VMEM],
        out_specs=_VMEM,
    )(a2, b2)
    return out.reshape(shape)


@jax.jit
def residual_sub_with_similarity(new, old, prev):
    """Fused residual + similarity metric; returns (residual, ratio scalar)."""
    shape = new.shape
    n2 = new.reshape(-1, shape[-1])
    o2 = old.reshape(-1, shape[-1])
    p2 = prev.reshape(-1, shape[-1])
    res, ratio = pl.pallas_call(
        _sub_similarity_kernel,
        out_shape=(jax.ShapeDtypeStruct(n2.shape, n2.dtype),
                   jax.ShapeDtypeStruct((1,), jnp.float32)),
        in_specs=[_VMEM, _VMEM, _VMEM],
        out_specs=(_VMEM, _SMEM),
    )(n2, o2, p2)
    return res.reshape(shape), ratio[0]


@jax.jit
def _abs_ratio(t1, t2):
    t1 = t1.reshape(-1, t1.shape[-1])
    t2 = t2.reshape(-1, t2.shape[-1])
    ratio = pl.pallas_call(
        _abs_ratio_kernel,
        out_shape=jax.ShapeDtypeStruct((1,), jnp.float32),
        in_specs=[_VMEM, _VMEM],
        out_specs=_SMEM,
    )(t1, t2)
    return ratio[0]


# ----------------------------------------------------------------------------
# Caching helpers (mirror the torch code, reductions fused on device)
# ----------------------------------------------------------------------------
def are_two_tensors_similar(t1, t2, *, threshold, parallelized=False):
    diff = float(_abs_ratio(t1, t2))       # single-scalar host fetch
    return (diff < threshold, diff)


def get_can_use_cache(first_hidden_states_residual, threshold, parallelized=False, mode="multi"):
    buffer_name = ("first_multi_hidden_states_residual" if mode == "multi"
                   else "first_single_hidden_states_residual")
    prev_res = get_buffer(buffer_name)
    if prev_res is None:
        return (False, threshold)
    return are_two_tensors_similar(prev_res, first_hidden_states_residual,
                                   threshold=threshold, parallelized=parallelized)


def get_can_use_cache_and_residual(new_states, original_states, threshold, mode="multi"):
    """Fused: computes first_residual AND the similarity ratio in one kernel."""
    buffer_name = ("first_multi_hidden_states_residual" if mode == "multi"
                   else "first_single_hidden_states_residual")
    prev = get_buffer(buffer_name)
    if prev is None:
        return False, threshold, residual_sub(new_states, original_states)
    res, ratio = residual_sub_with_similarity(new_states, original_states, prev)
    diff = float(ratio)                    # one scalar -> host (Python branch)
    return diff < threshold, diff, res


def apply_prev_hidden_states_residual(hidden_states, encoder_hidden_states=None, mode="multi"):
    if mode == "multi":
        hs_res = get_buffer("multi_hidden_states_residual")
        assert hs_res is not None
        hidden_states = residual_add(hidden_states, hs_res)
        if encoder_hidden_states is not None:
            enc_res = get_buffer("multi_encoder_hidden_states_residual")
            assert enc_res is not None
            encoder_hidden_states = residual_add(encoder_hidden_states, enc_res)
        return (hidden_states, encoder_hidden_states)
    elif mode == "single":
        single_res = get_buffer("single_hidden_states_residual")
        assert single_res is not None
        return residual_add(hidden_states, single_res)
    raise ValueError(f"Unknown mode {mode}")


def check_and_apply_cache(*, first_residual, can_use_cache, diff, hidden_states,
                          encoder_hidden_states=None, threshold, mode, verbose,
                          call_remaining_fn, remaining_kwargs):
    if can_use_cache:
        if verbose:
            print(f"[{mode.upper()}] Cache hit! diff={diff:.4f}")
        out = apply_prev_hidden_states_residual(hidden_states, encoder_hidden_states, mode=mode)
        updated_h, updated_enc = out if isinstance(out, tuple) else (out, None)
        return (updated_h, updated_enc, threshold)

    if verbose:
        print(f"[{mode.upper()}] Cache miss. diff={diff:.4f}")
    if mode == "multi":
        set_buffer("first_multi_hidden_states_residual", first_residual)
    else:
        set_buffer("first_single_hidden_states_residual", first_residual)

    result = call_remaining_fn(hidden_states=hidden_states,
                               encoder_hidden_states=encoder_hidden_states,
                               **remaining_kwargs)
    if mode == "multi":
        updated_h, updated_enc, hs_res, enc_res = result
        set_buffer("multi_hidden_states_residual", hs_res)
        set_buffer("multi_encoder_hidden_states_residual", enc_res)
        return (updated_h, updated_enc, threshold)
    elif mode == "single":
        updated_cat, cat_res = result
        set_buffer("single_hidden_states_residual", cat_res)
        return (updated_cat, None, threshold)
    raise ValueError(f"Unknown mode {mode}")


# ----------------------------------------------------------------------------
# Rotary-embedding packing (layout glue; defined for parity, not executed —
# the synthetic Pallas block does not consume the nunchaku CUDA layout).
# ----------------------------------------------------------------------------
def pad_tensor(t, multiple, dim):
    size = t.shape[dim]
    pad = (-size) % multiple
    if pad == 0:
        return t
    pads = [(0, 0)] * t.ndim
    pads[dim] = (0, pad)
    return jnp.pad(t, pads)


def pack_rotemb(rotemb):
    assert rotemb.dtype == jnp.float32
    B, M = rotemb.shape[0], rotemb.shape[1]
    D = rotemb.shape[2] * 2
    assert rotemb.shape == (B, M, D // 2, 1, 2)
    assert M % 16 == 0 and D % 8 == 0
    r = rotemb.reshape(B, M // 16, 16, D // 8, 8)
    r = jnp.transpose(r, (0, 1, 3, 2, 4))
    r = r.reshape(r.shape[0], r.shape[1], r.shape[2], 2, 8, 4, 2)
    r = jnp.transpose(r, (0, 1, 2, 4, 5, 3, 6))
    return r.reshape(B, M, D)


# ----------------------------------------------------------------------------
# The module
# ----------------------------------------------------------------------------
class FluxCachedTransformerBlocksJAX:
    def __init__(self, key, *, dim=32, mlp_hidden=64,
                 use_double_fb_cache=True,
                 residual_diff_threshold_multi=0.12,
                 residual_diff_threshold_single=0.09,
                 return_hidden_states_first=True,
                 return_hidden_states_only=False,
                 verbose=False):
        self.dim = dim
        self.dtype = jnp.bfloat16
        self.use_double_fb_cache = use_double_fb_cache
        self.residual_diff_threshold_multi = residual_diff_threshold_multi
        self.residual_diff_threshold_single = residual_diff_threshold_single
        self.return_hidden_states_first = return_hidden_states_first
        self.return_hidden_states_only = return_hidden_states_only
        self.verbose = verbose

        def init_stack(k, L):
            ks = jax.random.split(k, 7)
            std = 0.02
            return {
                "wmod": (std * jax.random.normal(ks[0], (L, dim, 2 * dim))).astype(self.dtype),
                "bmod": jnp.zeros((L, 1, 2 * dim), self.dtype),
                "wq": (std * jax.random.normal(ks[1], (L, dim, dim))).astype(self.dtype),
                "wk": (std * jax.random.normal(ks[2], (L, dim, dim))).astype(self.dtype),
                "wv": (std * jax.random.normal(ks[3], (L, dim, dim))).astype(self.dtype),
                "wo": (std * jax.random.normal(ks[4], (L, dim, dim))).astype(self.dtype),
                "w1": (std * jax.random.normal(ks[5], (L, dim, mlp_hidden))).astype(self.dtype),
                "w2": (std * jax.random.normal(ks[6], (L, mlp_hidden, dim))).astype(self.dtype),
            }

        k1, k2 = jax.random.split(key)
        self.multi_weights = init_stack(k1, num_transformer_blocks)
        self.single_weights = init_stack(k2, num_single_transformer_blocks)

    # --- synthetic stand-in for the opaque nunchaku `m.forward` --------------
    def m_forward(self, hidden_states, encoder_hidden_states, temb_bf,
                  skip_first_layer=False):
        cat = jnp.concatenate([encoder_hidden_states, hidden_states], axis=1)
        start = 1 if skip_first_layer else 0
        outs = []
        for b in range(cat.shape[0]):
            t = temb_bf[b:b + 1]
            x = run_layers(cat[b], t, self.multi_weights, start, num_transformer_blocks)
            x = run_layers(x, t, self.single_weights, 0, num_single_transformer_blocks)
            outs.append(x)
        return jnp.stack(outs, axis=0)

    # --- remaining-block runners (fused layer ranges) -------------------------
    def call_remaining_multi_transformer_blocks(self, hidden_states, encoder_hidden_states,
                                                temb, txt_tokens=None, **_):
        original_h, original_enc = hidden_states, encoder_hidden_states
        cat = jnp.concatenate([encoder_hidden_states, hidden_states], axis=1)
        cat_out = run_layers(cat[0], temb, self.multi_weights,
                             1, num_transformer_blocks)[None]
        encoder_hidden_states = cat_out[:, :txt_tokens, ...]
        hidden_states = cat_out[:, txt_tokens:, ...]
        hs_res = residual_sub(hidden_states, original_h)
        enc_res = residual_sub(encoder_hidden_states, original_enc)
        return hidden_states, encoder_hidden_states, hs_res, enc_res

    def call_remaining_FBCache_transformer_blocks(self, hidden_states, encoder_hidden_states,
                                                  temb, txt_tokens=None, **_):
        original_h, original_enc = hidden_states, encoder_hidden_states
        cat = jnp.concatenate([encoder_hidden_states, hidden_states], axis=1)
        x = run_layers(cat[0], temb, self.multi_weights, 1, num_transformer_blocks)
        x = run_layers(x, temb, self.single_weights, 0, num_single_transformer_blocks)
        cat_out = x[None]
        encoder_hidden_states = cat_out[:, :txt_tokens, ...]
        hidden_states = cat_out[:, txt_tokens:, ...]
        hs_res = residual_sub(hidden_states, original_h)
        enc_res = residual_sub(encoder_hidden_states, original_enc)
        return hidden_states, encoder_hidden_states, hs_res, enc_res

    def call_remaining_single_transformer_blocks(self, hidden_states, encoder_hidden_states=None,
                                                 temb=None, txt_tokens=None, **_):
        original = hidden_states
        out = run_layers(hidden_states[0], temb, self.single_weights,
                         1, num_single_transformer_blocks)[None]
        hs_res = residual_sub(out, original)
        return out, hs_res

    # --- forward (mirrors torch forward) --------------------------------------
    def forward(self, hidden_states, temb, encoder_hidden_states, image_rotary_emb,
                joint_attention_kwargs=None, controlnet_block_samples=None,
                controlnet_single_block_samples=None, skip_first_layer=False):
        batch_size = hidden_states.shape[0]
        txt_tokens = encoder_hidden_states.shape[1]
        img_tokens = hidden_states.shape[1]
        original_dtype = hidden_states.dtype

        hidden_states = hidden_states.astype(self.dtype)
        encoder_hidden_states = encoder_hidden_states.astype(self.dtype)
        temb_bf = temb.astype(self.dtype).reshape(batch_size, -1)

        assert image_rotary_emb.ndim == 6
        assert image_rotary_emb.shape[0] == 1 and image_rotary_emb.shape[1] == 1
        total_tokens = txt_tokens + img_tokens
        assert image_rotary_emb.shape[2] == total_tokens
        # TODO(synk): pack_rotemb/pad_tensor produce the nunchaku CUDA-kernel layout;
        # the synthetic Pallas block applies no RoPE, so the packing (dead work) is skipped.

        if self.residual_diff_threshold_multi < 0.0 or batch_size > 1:
            cat = self.m_forward(hidden_states, encoder_hidden_states, temb_bf,
                                 skip_first_layer).astype(original_dtype)
            enc = cat[:, :txt_tokens, ...]
            hs = cat[:, txt_tokens:, ...]
            if self.return_hidden_states_only:
                return hs
            return (hs, enc) if self.return_hidden_states_first else (enc, hs)

        temb2d = temb_bf[0:1]
        remaining_kwargs = {"temb": temb2d, "txt_tokens": txt_tokens}

        # --- first multi block (layer 0) on the concatenated tokens ----------
        original_hidden_states = hidden_states
        cat_in = jnp.concatenate([encoder_hidden_states, hidden_states], axis=1)
        cat_l0 = run_layers(cat_in[0], temb2d, self.multi_weights, 0, 1)[None]
        encoder_hidden_states = cat_l0[:, :txt_tokens, ...]
        hidden_states = cat_l0[:, txt_tokens:, ...]

        can_use_multi, diff_multi, first_res_multi = get_can_use_cache_and_residual(
            hidden_states, original_hidden_states,
            self.residual_diff_threshold_multi, mode="multi")

        call_remaining_fn = (self.call_remaining_multi_transformer_blocks
                             if self.use_double_fb_cache
                             else self.call_remaining_FBCache_transformer_blocks)

        updated_h, updated_enc, threshold = check_and_apply_cache(
            first_residual=first_res_multi, can_use_cache=can_use_multi,
            diff=diff_multi, hidden_states=hidden_states,
            encoder_hidden_states=encoder_hidden_states,
            threshold=self.residual_diff_threshold_multi, mode="multi",
            verbose=self.verbose, call_remaining_fn=call_remaining_fn,
            remaining_kwargs=remaining_kwargs)
        self.residual_diff_threshold_multi = threshold

        if not self.use_double_fb_cache:
            if self.return_hidden_states_only:
                return updated_h
            return ((updated_h, updated_enc) if self.return_hidden_states_first
                    else (updated_enc, updated_h))

        # --- first single block (layer 0) -------------------------------------
        cat = jnp.concatenate([updated_enc, updated_h], axis=1)
        original_cat = cat
        cat_s0 = run_layers(cat[0], temb2d, self.single_weights, 0, 1)[None]

        can_use_single, diff_single, first_res_single = get_can_use_cache_and_residual(
            cat_s0, original_cat, self.residual_diff_threshold_single, mode="single")

        updated_cat, _, threshold = check_and_apply_cache(
            first_residual=first_res_single, can_use_cache=can_use_single,
            diff=diff_single, hidden_states=cat_s0, encoder_hidden_states=None,
            threshold=self.residual_diff_threshold_single, mode="single",
            verbose=self.verbose,
            call_remaining_fn=self.call_remaining_single_transformer_blocks,
            remaining_kwargs=remaining_kwargs)
        self.residual_diff_threshold_single = threshold

        final_enc = updated_cat[:, :txt_tokens, ...].astype(original_dtype)
        final_h = updated_cat[:, txt_tokens:, ...].astype(original_dtype)
        if self.return_hidden_states_only:
            return final_h
        return ((final_h, final_enc) if self.return_hidden_states_first
                else (final_enc, final_h))


# ----------------------------------------------------------------------------
if __name__ == "__main__":
    key = jax.random.PRNGKey(0)
    kh, ke, kt, kr, kw = jax.random.split(key, 5)

    B, txt_tokens, img_tokens, D = 1, 8, 16, 32
    head_dim = 16  # rotary D

    hidden_states = jax.random.normal(kh, (B, img_tokens, D), jnp.float32)
    encoder_hidden_states = jax.random.normal(ke, (B, txt_tokens, D), jnp.float32)
    temb = jax.random.normal(kt, (B, D), jnp.float32)
    image_rotary_emb = jax.random.normal(
        kr, (1, 1, txt_tokens + img_tokens, head_dim // 2, 1, 2), jnp.float32)

    model = FluxCachedTransformerBlocksJAX(
        kw, dim=D, mlp_hidden=2 * D,
        use_double_fb_cache=True,
        residual_diff_threshold_multi=0.12,
        residual_diff_threshold_single=0.09,
        return_hidden_states_first=True,
        return_hidden_states_only=False,
        verbose=False)

    ctx = CacheContext()
    with cache_context(ctx):
        # first call: cache miss -> fused 19-multi + 38-single Pallas layer loops
        h1, e1 = model.forward(hidden_states, temb, encoder_hidden_states, image_rotary_emb)
        # second call with identical inputs: cache hit -> fused similarity + residual-add
        h2, e2 = model.forward(hidden_states, temb, encoder_hidden_states, image_rotary_emb)

    jax.block_until_ready((h1, e1, h2, e2))

    assert h1.shape == (B, img_tokens, D) and e1.shape == (B, txt_tokens, D)
    assert h2.shape == (B, img_tokens, D) and e2.shape == (B, txt_tokens, D)
    assert bool(jnp.all(jnp.isfinite(h1))) and bool(jnp.all(jnp.isfinite(e1)))
    assert bool(jnp.all(jnp.isfinite(h2))) and bool(jnp.all(jnp.isfinite(e2)))
    # the second call must have populated / reused the residual cache
    assert ctx.get_buffer("multi_hidden_states_residual") is not None
    assert ctx.get_buffer("single_hidden_states_residual") is not None

    print("KERNEL_OK")
</pallas_src>

<mosaic_0001>
module attributes {stable_mosaic.version = 11 : i64} {
  func.func @_fused_layers_kernel(%arg0: i32, %arg1: memref<24x32xbf16, #tpu.memory_space<vmem>>, %arg2: memref<1x32xbf16, #tpu.memory_space<vmem>>, %arg3: memref<1x32x64xbf16, #tpu.memory_space<vmem>>, %arg4: memref<1x1x64xbf16, #tpu.memory_space<vmem>>, %arg5: memref<1x32x32xbf16, #tpu.memory_space<vmem>>, %arg6: memref<1x32x32xbf16, #tpu.memory_space<vmem>>, %arg7: memref<1x32x32xbf16, #tpu.memory_space<vmem>>, %arg8: memref<1x32x32xbf16, #tpu.memory_space<vmem>>, %arg9: memref<1x32x64xbf16, #tpu.memory_space<vmem>>, %arg10: memref<1x64x32xbf16, #tpu.memory_space<vmem>>, %arg11: memref<24x32xbf16, #tpu.memory_space<vmem>>, %arg12: memref<24x32xf32, #tpu.memory_space<vmem>>) attributes {dimension_semantics = [#tpu.dimension_semantics<arbitrary>], iteration_bounds = array<i64: 1>, scalar_prefetch = 0 : i64, scratch_operands = 1 : i64, tpu.core_type = #tpu.core_type<tc>, window_params = [{pipeline_mode = #tpu.pipeline_mode<synchronous>, transform_indices = @transform_0, window_bounds = array<i64: 24, 32>}, {pipeline_mode = #tpu.pipeline_mode<synchronous>, transform_indices = @transform_1, window_bounds = array<i64: 1, 32>}, {transform_indices = @transform_2, window_bounds = array<i64: 1, 32, 64>}, {transform_indices = @transform_3, window_bounds = array<i64: 1, 1, 64>}, {transform_indices = @transform_4, window_bounds = array<i64: 1, 32, 32>}, {transform_indices = @transform_5, window_bounds = array<i64: 1, 32, 32>}, {transform_indices = @transform_6, window_bounds = array<i64: 1, 32, 32>}, {transform_indices = @transform_7, window_bounds = array<i64: 1, 32, 32>}, {transform_indices = @transform_8, window_bounds = array<i64: 1, 32, 64>}, {transform_indices = @transform_9, window_bounds = array<i64: 1, 64, 32>}, {pipeline_mode = #tpu.pipeline_mode<synchronous>, transform_indices = @transform_10, window_bounds = array<i64: 24, 32>}]} {
    %c0_i32 = arith.constant 0 : i32
    %0 = arith.cmpi eq, %arg0, %c0_i32 : i32
    %1 = arith.extui %0 : i1 to i32
    %c0_i32_0 = arith.constant 0 : i32
    %2 = arith.cmpi ne, %1, %c0_i32_0 : i32
    scf.if %2 {
      %c0_48 = arith.constant 0 : index
      %c0_49 = arith.constant 0 : index
      %78 = vector.load %arg1[%c0_48, %c0_49] : memref<24x32xbf16, #tpu.memory_space<vmem>>, vector<24x32xbf16>
      %79 = arith.extf %78 : vector<24x32xbf16> to vector<24x32xf32>
      %c0_50 = arith.constant 0 : index
      %c0_51 = arith.constant 0 : index
      %80 = vector.load %arg12[%c0_50, %c0_51] : memref<24x32xf32, #tpu.memory_space<vmem>>, vector<24x32xf32>
      tpu.vector_store %arg12[%c0_50, %c0_51], %79 {strides = array<i32>} : memref<24x32xf32, #tpu.memory_space<vmem>>, vector<24x32xf32>,
    } else {
    }
    %c0 = arith.constant 0 : index
    %c0_1 = arith.constant 0 : index
    %3 = vector.load %arg12[%c0, %c0_1] : memref<24x32xf32, #tpu.memory_space<vmem>>, vector<24x32xf32>
    %c0_2 = arith.constant 0 : index
    %c0_3 = arith.constant 0 : index
    %4 = vector.load %arg2[%c0_2, %c0_3] : memref<1x32xbf16, #tpu.memory_space<vmem>>, vector<1x32xbf16>
    %c0_4 = arith.constant 0 : index
    %c0_5 = arith.constant 0 : index
    %c0_6 = arith.constant 0 : index
    %5 = vector.load %arg3[%c0_4, %c0_5, %c0_6] : memref<1x32x64xbf16, #tpu.memory_space<vmem>>, vector<1x32x64xbf16>
    %6 = vector.shape_cast %5 : vector<1x32x64xbf16> to vector<32x64xbf16>
    %cst = arith.constant dense<0.000000e+00> : vector<1x64xf32>
    %7 = tpu.matmul %4, %6, %cst {dimension_numbers = #tpu.dot_dimension_numbers<[1], [0], [0], [1], [0, 0, 1, 1], [], []>} : vector<1x32xbf16>, vector<32x64xbf16>, vector<1x64xf32> -> vector<1x64xf32>
    %c0_7 = arith.constant 0 : index
    %c0_8 = arith.constant 0 : index
    %c0_9 = arith.constant 0 : index
    %8 = vector.load %arg4[%c0_7, %c0_8, %c0_9] : memref<1x1x64xbf16, #tpu.memory_space<vmem>>, vector<1x1x64xbf16>
    %9 = vector.shape_cast %8 : vector<1x1x64xbf16> to vector<1x64xbf16>
    %10 = arith.extf %9 : vector<1x64xbf16> to vector<1x64xf32>
    %11 = arith.addf %7, %10 : vector<1x64xf32>
    %12 = vector.extract_strided_slice %11 {offsets = [0, 0], sizes = [1, 32], strides = [1, 1]} : vector<1x64xf32> to vector<1x32xf32>
    %13 = vector.extract_strided_slice %11 {offsets = [0, 32], sizes = [1, 32], strides = [1, 1]} : vector<1x64xf32> to vector<1x32xf32>
    %cst_10 = arith.constant 1.000000e+00 : f32
    %14 = vector.broadcast %cst_10 : f32 to vector<1x32xf32>
    %15 = arith.addf %14, %13 : vector<1x32xf32>
    %16 = vector.broadcast %15 : vector<1x32xf32> to vector<24x32xf32>
    %17 = arith.mulf %3, %16 : vector<24x32xf32>
    %18 = vector.broadcast %12 : vector<1x32xf32> to vector<24x32xf32>
    %19 = arith.addf %17, %18 : vector<24x32xf32>
    %20 = arith.truncf %19 : vector<24x32xf32> to vector<24x32xbf16>
    %c0_11 = arith.constant 0 : index
    %c0_12 = arith.constant 0 : index
    %c0_13 = arith.constant 0 : index
    %21 = vector.load %arg5[%c0_11, %c0_12, %c0_13] : memref<1x32x32xbf16, #tpu.memory_space<vmem>>, vector<1x32x32xbf16>
    %22 = vector.shape_cast %21 : vector<1x32x32xbf16> to vector<32x32xbf16>
    %cst_14 = arith.constant dense<0.000000e+00> : vector<24x32xf32>
    %23 = tpu.matmul %20, %22, %cst_14 {dimension_numbers = #tpu.dot_dimension_numbers<[1], [0], [0], [1], [0, 0, 1, 1], [], []>} : vector<24x32xbf16>, vector<32x32xbf16>, vector<24x32xf32> -> vector<24x32xf32>
    %c0_15 = arith.constant 0 : index
    %c0_16 = arith.constant 0 : index
    %c0_17 = arith.constant 0 : index
    %24 = vector.load %arg6[%c0_15, %c0_16, %c0_17] : memref<1x32x32xbf16, #tpu.memory_space<vmem>>, vector<1x32x32xbf16>
    %25 = vector.shape_cast %24 : vector<1x32x32xbf16> to vector<32x32xbf16>
    %cst_18 = arith.constant dense<0.000000e+00> : vector<24x32xf32>
    %26 = tpu.matmul %20, %25, %cst_18 {dimension_numbers = #tpu.dot_dimension_numbers<[1], [0], [0], [1], [0, 0, 1, 1], [], []>} : vector<24x32xbf16>, vector<32x32xbf16>, vector<24x32xf32> -> vector<24x32xf32>
    %c0_19 = arith.constant 0 : index
    %c0_20 = arith.constant 0 : index
    %c0_21 = arith.constant 0 : index
    %27 = vector.load %arg7[%c0_19, %c0_20, %c0_21] : memref<1x32x32xbf16, #tpu.memory_space<vmem>>, vector<1x32x32xbf16>
    %28 = vector.shape_cast %27 : vector<1x32x32xbf16> to vector<32x32xbf16>
    %cst_22 = arith.constant dense<0.000000e+00> : vector<24x32xf32>
    %29 = tpu.matmul %20, %28, %cst_22 {dimension_numbers = #tpu.dot_dimension_numbers<[1], [0], [0], [1], [0, 0, 1, 1], [], []>} : vector<24x32xbf16>, vector<32x32xbf16>, vector<24x32xf32> -> vector<24x32xf32>
    %30 = arith.truncf %23 : vector<24x32xf32> to vector<24x32xbf16>
    %31 = arith.truncf %26 : vector<24x32xf32> to vector<24x32xbf16>
    %cst_23 = arith.constant dense<0.000000e+00> : vector<24x24xf32>
    %32 = tpu.matmul %30, %31, %cst_23 {dimension_numbers = #tpu.dot_dimension_numbers<[1], [1], [0], [0], [0, 0, 1, 0], [], []>} : vector<24x32xbf16>, vector<24x32xbf16>, vector<24x24xf32> -> vector<24x24xf32>
    %cst_24 = arith.constant 0.176776692 : f32
    %33 = vector.broadcast %cst_24 : f32 to vector<24x24xf32>
    %34 = arith.mulf %32, %33 : vector<24x24xf32>
    %cst_25 = arith.constant dense<0xFF800000> : vector<24xf32>
    %35 = vector.multi_reduction <maximumf>, %34, %cst_25 [1] : vector<24x24xf32> to vector<24xf32>
    %36 = vector.shape_cast %35 : vector<24xf32> to vector<24x1xf32>
    %37 = vector.broadcast %36 : vector<24x1xf32> to vector<24x24xf32>
    %38 = arith.subf %34, %37 : vector<24x24xf32>
    %39 = math.exp %38 : vector<24x24xf32>
    %cst_26 = arith.constant dense<0.000000e+00> : vector<24xf32>
    %40 = vector.multi_reduction <add>, %39, %cst_26 [1] : vector<24x24xf32> to vector<24xf32>
    %41 = vector.shape_cast %40 : vector<24xf32> to vector<24x1xf32>
    %42 = tpu.reciprocal %41 {approx = true} : vector<24x1xf32> -> vector<24x1xf32>
    %43 = vector.broadcast %42 : vector<24x1xf32> to vector<24x24xf32>
    %44 = arith.mulf %39, %43 : vector<24x24xf32>
    %45 = arith.truncf %44 : vector<24x24xf32> to vector<24x24xbf16>
    %46 = arith.truncf %29 : vector<24x32xf32> to vector<24x32xbf16>
    %cst_27 = arith.constant dense<0.000000e+00> : vector<24x32xf32>
    %47 = tpu.matmul %45, %46, %cst_27 {dimension_numbers = #tpu.dot_dimension_numbers<[1], [0], [0], [1], [0, 0, 1, 1], [], []>} : vector<24x24xbf16>, vector<24x32xbf16>, vector<24x32xf32> -> vector<24x32xf32>
    %48 = arith.truncf %47 : vector<24x32xf32> to vector<24x32xbf16>
    %c0_28 = arith.constant 0 : index
    %c0_29 = arith.constant 0 : index
    %c0_30 = arith.constant 0 : index
    %49 = vector.load %arg8[%c0_28, %c0_29, %c0_30] : memref<1x32x32xbf16, #tpu.memory_space<vmem>>, vector<1x32x32xbf16>
    %50 = vector.shape_cast %49 : vector<1x32x32xbf16> to vector<32x32xbf16>
    %cst_31 = arith.constant dense<0.000000e+00> : vector<24x32xf32>
    %51 = tpu.matmul %48, %50, %cst_31 {dimension_numbers = #tpu.dot_dimension_numbers<[1], [0], [0], [1], [0, 0, 1, 1], [], []>} : vector<24x32xbf16>, vector<32x32xbf16>, vector<24x32xf32> -> vector<24x32xf32>
    %52 = arith.addf %3, %51 : vector<24x32xf32>
    %53 = arith.truncf %52 : vector<24x32xf32> to vector<24x32xbf16>
    %c0_32 = arith.constant 0 : index
    %c0_33 = arith.constant 0 : index
    %c0_34 = arith.constant 0 : index
    %54 = vector.load %arg9[%c0_32, %c0_33, %c0_34] : memref<1x32x64xbf16, #tpu.memory_space<vmem>>, vector<1x32x64xbf16>
    %55 = vector.shape_cast %54 : vector<1x32x64xbf16> to vector<32x64xbf16>
    %cst_35 = arith.constant dense<0.000000e+00> : vector<24x64xf32>
    %56 = tpu.matmul %53, %55, %cst_35 {dimension_numbers = #tpu.dot_dimension_numbers<[1], [0], [0], [1], [0, 0, 1, 1], [], []>} : vector<24x32xbf16>, vector<32x64xbf16>, vector<24x64xf32> -> vector<24x64xf32>
    %57 = arith.mulf %56, %56 : vector<24x64xf32>
    %58 = arith.mulf %56, %57 : vector<24x64xf32>
    %cst_36 = arith.constant 4.471500e-02 : f32
    %59 = vector.broadcast %cst_36 : f32 to vector<24x64xf32>
    %60 = arith.mulf %59, %58 : vector<24x64xf32>
    %61 = arith.addf %56, %60 : vector<24x64xf32>
    %cst_37 = arith.constant 0.797884583 : f32
    %62 = vector.broadcast %cst_37 : f32 to vector<24x64xf32>
    %63 = arith.mulf %62, %61 : vector<24x64xf32>
    %64 = math.tanh %63 : vector<24x64xf32>
    %cst_38 = arith.constant 1.000000e+00 : f32
    %65 = vector.broadcast %cst_38 : f32 to vector<24x64xf32>
    %66 = arith.addf %65, %64 : vector<24x64xf32>
    %cst_39 = arith.constant 5.000000e-01 : f32
    %67 = vector.broadcast %cst_39 : f32 to vector<24x64xf32>
    %68 = arith.mulf %67, %66 : vector<24x64xf32>
    %69 = arith.mulf %56, %68 : vector<24x64xf32>
    %70 = arith.truncf %69 : vector<24x64xf32> to vector<24x64xbf16>
    %c0_40 = arith.constant 0 : index
    %c0_41 = arith.constant 0 : index
    %c0_42 = arith.constant 0 : index
    %71 = vector.load %arg10[%c0_40, %c0_41, %c0_42] : memref<1x64x32xbf16, #tpu.memory_space<vmem>>, vector<1x64x32xbf16>
    %72 = vector.shape_cast %71 : vector<1x64x32xbf16> to vector<64x32xbf16>
    %cst_43 = arith.constant dense<0.000000e+00> : vector<24x32xf32>
    %73 = tpu.matmul %70, %72, %cst_43 {dimension_numbers = #tpu.dot_dimension_numbers<[1], [0], [0], [1], [0, 0, 1, 1], [], []>} : vector<24x64xbf16>, vector<64x32xbf16>, vector<24x32xf32> -> vector<24x32xf32>
    %74 = arith.addf %52, %73 : vector<24x32xf32>
    %c0_44 = arith.constant 0 : index
    %c0_45 = arith.constant 0 : index
    %75 = vector.load %arg12[%c0_44, %c0_45] : memref<24x32xf32, #tpu.memory_space<vmem>>, vector<24x32xf32>
    tpu.vector_store %arg12[%c0_44, %c0_45], %74 {strides = array<i32>} : memref<24x32xf32, #tpu.memory_space<vmem>>, vector<24x32xf32>,
    %76 = arith.truncf %74 : vector<24x32xf32> to vector<24x32xbf16>
    %c0_46 = arith.constant 0 : index
    %c0_47 = arith.constant 0 : index
    %77 = vector.load %arg11[%c0_46, %c0_47] : memref<24x32xbf16, #tpu.memory_space<vmem>>, vector<24x32xbf16>
    tpu.vector_store %arg11[%c0_46, %c0_47], %76 {strides = array<i32>} : memref<24x32xbf16, #tpu.memory_space<vmem>>, vector<24x32xbf16>,
    return
  }
  func.func @transform_0(%arg0: i32) -> (i32, i32) {
    %c0_i32 = arith.constant 0 : i32
    %c0_i32_0 = arith.constant 0 : i32
    %c0_i32_1 = arith.constant 0 : i32
    return %c0_i32, %c0_i32_0 : i32, i32
  }
  func.func @transform_1(%arg0: i32) -> (i32, i32) {
    %c0_i32 = arith.constant 0 : i32
    %c0_i32_0 = arith.constant 0 : i32
    %c0_i32_1 = arith.constant 0 : i32
    return %c0_i32, %c0_i32_0 : i32, i32
  }
  func.func @transform_2(%arg0: i32) -> (i32, i32, i32) {
    %c0_i32 = arith.constant 0 : i32
    %0 = arith.addi %arg0, %c0_i32 : i32
    %c0_i32_0 = arith.constant 0 : i32
    %c0_i32_1 = arith.constant 0 : i32
    %c0_i32_2 = arith.constant 0 : i32
    return %0, %c0_i32_0, %c0_i32_1 : i32, i32, i32
  }
  func.func @transform_3(%arg0: i32) -> (i32, i32, i32) {
    %c0_i32 = arith.constant 0 : i32
    %0 = arith.addi %arg0, %c0_i32 : i32
    %c0_i32_0 = arith.constant 0 : i32
    %c0_i32_1 = arith.constant 0 : i32
    %c0_i32_2 = arith.constant 0 : i32
    return %0, %c0_i32_0, %c0_i32_1 : i32, i32, i32
  }
  func.func @transform_4(%arg0: i32) -> (i32, i32, i32) {
    %c0_i32 = arith.constant 0 : i32
    %0 = arith.addi %arg0, %c0_i32 : i32
    %c0_i32_0 = arith.constant 0 : i32
    %c0_i32_1 = arith.constant 0 : i32
    %c0_i32_2 = arith.constant 0 : i32
    return %0, %c0_i32_0, %c0_i32_1 : i32, i32, i32
  }
  func.func @transform_5(%arg0: i32) -> (i32, i32, i32) {
    %c0_i32 = arith.constant 0 : i32
    %0 = arith.addi %arg0, %c0_i32 : i32
    %c0_i32_0 = arith.constant 0 : i32
    %c0_i32_1 = arith.constant 0 : i32
    %c0_i32_2 = arith.constant 0 : i32
    return %0, %c0_i32_0, %c0_i32_1 : i32, i32, i32
  }
  func.func @transform_6(%arg0: i32) -> (i32, i32, i32) {
    %c0_i32 = arith.constant 0 : i32
    %0 = arith.addi %arg0, %c0_i32 : i32
    %c0_i32_0 = arith.constant 0 : i32
    %c0_i32_1 = arith.constant 0 : i32
    %c0_i32_2 = arith.constant 0 : i32
    return %0, %c0_i32_0, %c0_i32_1 : i32, i32, i32
  }
  func.func @transform_7(%arg0: i32) -> (i32, i32, i32) {
    %c0_i32 = arith.constant 0 : i32
    %0 = arith.addi %arg0, %c0_i32 : i32
    %c0_i32_0 = arith.constant 0 : i32
    %c0_i32_1 = arith.constant 0 : i32
    %c0_i32_2 = arith.constant 0 : i32
    return %0, %c0_i32_0, %c0_i32_1 : i32, i32, i32
  }
  func.func @transform_8(%arg0: i32) -> (i32, i32, i32) {
    %c0_i32 = arith.constant 0 : i32
    %0 = arith.addi %arg0, %c0_i32 : i32
    %c0_i32_0 = arith.constant 0 : i32
    %c0_i32_1 = arith.constant 0 : i32
    %c0_i32_2 = arith.constant 0 : i32
    return %0, %c0_i32_0, %c0_i32_1 : i32, i32, i32
  }
  func.func @transform_9(%arg0: i32) -> (i32, i32, i32) {
    %c0_i32 = arith.constant 0 : i32
    %0 = arith.addi %arg0, %c0_i32 : i32
    %c0_i32_0 = arith.constant 0 : i32
    %c0_i32_1 = arith.constant 0 : i32
    %c0_i32_2 = arith.constant 0 : i32
    return %0, %c0_i32_0, %c0_i32_1 : i32, i32, i32
  }
  func.func @transform_10(%arg0: i32) -> (i32, i32) {
    %c0_i32 = arith.constant 0 : i32
    %c0_i32_0 = arith.constant 0 : i32
    %c0_i32_1 = arith.constant 0 : i32
    return %c0_i32, %c0_i32_0 : i32, i32
  }
}

</mosaic_0001>

<llo_original>
// kernel: _run_layers_impl.1
$region0: #{_run_layers_impl.1}
  #allocation0 [shape = 'u32[]', space=smem, size = 0x4, offset = 0x4, fixed_abs, tag = 'smem constant byte address 0x4 - core index']
  #allocation1 [shape = 'u32[144,128]{1,0:T(1,128)}', space=vmem, size = 0x12000, scoped, tag = 'internal scratch']
  #allocation2 [shape = 'f32[24,32]{1,0:T(8,128)}', space=vmem, size = 0x3000, scoped, tag = 'scratch operand']
  %s0 = inlined_call_operand.vmem [shape: bf16[24,32], index: 0, kind: input, shape index: {}]
  %s1 = inlined_call_operand.vmem [shape: bf16[1,32], index: 1, kind: input, shape index: {}]
  %s2 = inlined_call_operand.vmem [shape: bf16[19,32,64], index: 2, kind: input, shape index: {}]
  %s3 = inlined_call_operand.vmem [shape: bf16[19,1,64], index: 3, kind: input, shape index: {}]
  %s4 = inlined_call_operand.vmem [shape: bf16[19,32,32], index: 4, kind: input, shape index: {}]
  %s5 = inlined_call_operand.vmem [shape: bf16[19,32,32], index: 5, kind: input, shape index: {}]
  %s6 = inlined_call_operand.hbm [shape: bf16[19,32,32], index: 6, kind: input, shape index: {}]
  %s7 = inlined_call_operand.hbm [shape: bf16[19,32,32], index: 7, kind: input, shape index: {}]
  %s8 = inlined_call_operand.hbm [shape: bf16[19,32,64], index: 8, kind: input, shape index: {}]
  %s9 = inlined_call_operand.vmem [shape: bf16[19,64,32], index: 9, kind: input, shape index: {}]
  %s10 = inlined_call_operand.hbm [shape: bf16[24,32], index: 10, kind: output, shape index: {}]
  %s11 = sld [smem:[#allocation0]]
  $region66: #{_run_layers_impl.1} parent=0
    _
  %s13 = ssub.s32 1, %s11
  %s14 = scalar_select 0, %s13, %s11
  $region1: #{_run_layers_impl.1} parent=0
    #allocation3 [shape = 'u8[8192]{0}', space=vmem, size = 0x2000, scoped, tag = 'input window, operand 6, single buffered']
    #allocation4 [shape = 's32[1]{0}', space=sflag, size = 0x4, scoped, tag = 'scoped memory for _run_layers_impl.1']
    #allocation5 [shape = 's32[1]{0}', space=sflag, size = 0x4, scoped, tag = 'scoped memory for _run_layers_impl.1']
    #allocation6 [shape = 'u8[8192]{0}', space=vmem, size = 0x2000, scoped, tag = 'input window, operand 7, single buffered']
    #allocation7 [shape = 's32[1]{0}', space=sflag, size = 0x4, scoped, tag = 'scoped memory for _run_layers_impl.1']
    #allocation8 [shape = 'u8[8192]{0}', space=vmem, size = 0x2000, scoped, tag = 'input window, operand 8, single buffered']
    #allocation9 [shape = 'u8[6144]{0}', space=vmem, size = 0x1800, scoped, tag = 'output window, operand 0, single buffered']
    %15 = vsyncpa [#allocation4], 0
    %16 = vsyncpa [#allocation7], 0
    %17 = vsyncpa [#allocation5], 0
    // Predicated region
    $region2: #{_run_layers_impl.1} parent=1 // pred_check
      _
    $region3: #{_run_layers_impl.1} parent=1 // pred_check_branch
      %19 = sbr.rel (0) target = $region5
    $region4: #{_run_layers_impl.1} parent=1 // pred_region
      _
    $region5: #{_run_layers_impl.1} parent=1 // pred_fallthru
      _
    // Predicated region
    $region6: #{_run_layers_impl.1} parent=1 // pred_check
      _
    $region7: #{_run_layers_impl.1} parent=1 // pred_check_branch
      %21 = sbr.rel (0) target = $region9
    $region8: #{_run_layers_impl.1} parent=1 // pred_region
      _
    $region9: #{_run_layers_impl.1} parent=1 // pred_fallthru
      _
    // Predicated region
    $region10: #{_run_layers_impl.1} parent=1 // pred_check
      _
    $region11: #{_run_layers_impl.1} parent=1 // pred_check_branch
      %23 = sbr.rel (0) target = $region13
    $region12: #{_run_layers_impl.1} parent=1 // pred_region
      _
    $region13: #{_run_layers_impl.1} parent=1 // pred_fallthru
      _
    // Predicated region
    $region14: #{_run_layers_impl.1} parent=1 // pred_check
      _
    $region15: #{_run_layers_impl.1} parent=1 // pred_check_branch
      %25 = sbr.rel (0) target = $region17
    $region16: #{_run_layers_impl.1} parent=1 // pred_region
      _
    $region17: #{_run_layers_impl.1} parent=1 // pred_fallthru
      _
    // Predicated region
    $region18: #{_run_layers_impl.1} parent=1 // pred_check
      _
    $region19: #{_run_layers_impl.1} parent=1 // pred_check_branch
      %27 = sbr.rel (0) target = $region21
    $region20: #{_run_layers_impl.1} parent=1 // pred_region
      _
    $region21: #{_run_layers_impl.1} parent=1 // pred_fallthru
      _
    // Predicated region
    $region22: #{_run_layers_impl.1} parent=1 // pred_check
      _
    $region23: #{_run_layers_impl.1} parent=1 // pred_check_branch
      %29 = sbr.rel (0) target = $region25
    $region24: #{_run_layers_impl.1} parent=1 // pred_region
      _
    $region25: #{_run_layers_impl.1} parent=1 // pred_fallthru
      _
    // Predicated region
    $region26: #{_run_layers_impl.1} parent=1 // pred_check
      _
    $region27: #{_run_layers_impl.1} parent=1 // pred_check_branch
      %31 = sbr.rel (0) target = $region29
    $region28: #{_run_layers_impl.1} parent=1 // pred_region
      %s33 = ssub.s32 256, 256
      %34 = vsyncadd [#allocation4], %s33
      %s35 = sshll.u32 [#allocation3], 4
      %s36 = int_to_ptr.vmem [resolvable:$true] %s35
      %41 = dma.hbm_to_vmem [thread:$0]  %s6, 256, %s36, [#allocation4], 64, 64, 4
    $region29: #{_run_layers_impl.1} parent=1 // pred_fallthru
      _
    // Predicated region
    $region30: #{_run_layers_impl.1} parent=1 // pred_check
      _
    $region31: #{_run_layers_impl.1} parent=1 // pred_check_branch
      %43 = sbr.rel (0) target = $region33
    $region32: #{_run_layers_impl.1} parent=1 // pred_region
      %s45 = ssub.s32 256, 256
      %46 = vsyncadd [#allocation7], %s45
      %s47 = sshll.u32 [#allocation6], 4
      %s48 = int_to_ptr.vmem [resolvable:$true] %s47
      %53 = dma.hbm_to_vmem [thread:$0]  %s7, 256, %s48, [#allocation7], 64, 64, 4
    $region33: #{_run_layers_impl.1} parent=1 // pred_fallthru
      _
    // Predicated region
    $region34: #{_run_layers_impl.1} parent=1 // pred_check
      _
    $region35: #{_run_layers_impl.1} parent=1 // pred_check_branch
      %55 = sbr.rel (0) target = $region37
    $region36: #{_run_layers_impl.1} parent=1 // pred_region
      %s57 = ssub.s32 256, 256
      %58 = vsyncadd [#allocation7], %s57
      %s59 = sshll.u32 [#allocation8], 4
      %s60 = int_to_ptr.vmem [resolvable:$true] %s59
      %65 = dma.hbm_to_vmem [thread:$0]  %s8, 256, %s60, [#allocation7], 64, 64, 4
    $region37: #{_run_layers_impl.1} parent=1 // pred_fallthru
      _
    // Predicated region
    $region38: #{_run_layers_impl.1} parent=1 // pred_check
      _
    $region39: #{_run_layers_impl.1} parent=1 // pred_check_branch
      %67 = sbr.rel (0) target = $region41
    $region40: #{_run_layers_impl.1} parent=1 // pred_region
      _
    $region41: #{_run_layers_impl.1} parent=1 // pred_fallthru
      _
    // Predicated region
    $region42: #{_run_layers_impl.1} parent=1 // pred_check
      _
    $region43: #{_run_layers_impl.1} parent=1 // pred_check_branch
      %69 = sbr.rel (0) target = $region45
    $region44: #{_run_layers_impl.1} parent=1 // pred_region
      %70 = dma.done [#allocation4], 256
    $region45: #{_run_layers_impl.1} parent=1 // pred_fallthru
      _
    // Predicated region
    $region46: #{_run_layers_impl.1} parent=1 // pred_check
      _
    $region47: #{_run_layers_impl.1} parent=1 // pred_check_branch
      %72 = sbr.rel (0) target = $region49
    $region48: #{_run_layers_impl.1} parent=1 // pred_region
      %73 = dma.done [#allocation7], 256
    $region49: #{_run_layers_impl.1} parent=1 // pred_fallthru
      _
    // Predicated region
    $region50: #{_run_layers_impl.1} parent=1 // pred_check
      _
    $region51: #{_run_layers_impl.1} parent=1 // pred_check_branch
      %75 = sbr.rel (0) target = $region53
    $region52: #{_run_layers_impl.1} parent=1 // pred_region
      %76 = dma.done [#allocation7], 256
    $region53: #{_run_layers_impl.1} parent=1 // pred_fallthru
      _
    %p78 = scmp.eq.s32.totalorder 0, 0
    // Predicated region
    $region54: #{_run_layers_impl.1} parent=1 // pred_check
      %p79 = pneg %p78
    $region55: #{_run_layers_impl.1} parent=1 // pred_check_branch
      %81 = sbr.rel (%p79) target = $region57
    $region56: #{_run_layers_impl.1} parent=1 // pred_region
      %v82 = vld [vmem:[%s0] sm:$0xf]
      %v83 = vld [vmem:[%s0 + $0x4] sm:$0xf]
      %v84 = vld [vmem:[%s0 + $0x8] sm:$0xf]
      %v85 = vunpack.c.l.bf16 %v82
      %v86 = vunpack.c.l.bf16 %v83
      %v87 = vunpack.c.l.bf16 %v84
      %vm88 = vcmask 261120
      %89 = vst.msk [vmem:[#allocation2] sm:$0xff] %vm88, %v85
      %90 = vst.msk [vmem:[#allocation2 + $0x8] sm:$0xff] %vm88, %v86
      %91 = vst.msk [vmem:[#allocation2 + $0x10] sm:$0xff] %vm88, %v87
    $region57: #{_run_layers_impl.1} parent=1 // pred_fallthru
      _
    %v92 = vld [vmem:[#allocation2] sm:$0xff]
    %v93 = vld [vmem:[#allocation2 + $0x8] sm:$0xff]
    %v94 = vld [vmem:[#allocation2 + $0x10] sm:$0xff]
    %v95 = vld [vmem:[%s1] sm:$0x1]
    %v96 = vld [vmem:[%s2] sm:$0xf]
    %v97 = vld [vmem:[%s2 + $0x4] sm:$0xf]
    %v98 = vld [vmem:[%s2 + $0x8] sm:$0xf]
    %v99 = vld [vmem:[%s2 + $0xc] sm:$0xf]
    %v100 = vld [vmem:[%s3] sm:$0x1]
    %v101 = vunpack.c.l.bf16 %v100
    %v106 = vunpack.c.l.b16 %v96
    %v107 = vunpack.c.l.b16 %v97
    %v108 = vunpack.c.l.b16 %v98
    %v109 = vunpack.c.l.b16 %v99
    %v110 = vpack.c.b16 %v107, %v106
    %v111 = vpack.c.b16 %v109, %v108
    %vm114 = vcmask 261120
    %v116 = vsel %vm114, %v95, 0
    %118 = vmatprep.subr.bf16.mxu0 0
    %119 = vmatpush1.bf16.msra.mxu0 %v110
    %120 = vmatprep.subr.bf16.mxu0 0
    %121 = vmatpush1.bf16.msra.mxu0 %v111
    %122 = vmatprep.subr.bf16.mxu0 0
    %123 = vmatpush1.bf16.msra.mxu0 0
    %124 = vmatprep.subr.bf16.mxu0 0
    %125 = vmatpush1.bf16.msra.mxu0 0
    %126 = vmatprep.subr.bf16.mxu0 0
    %127 = vmatpush1.bf16.msra.mxu0 0
    %128 = vmatprep.subr.bf16.mxu0 0
    %129 = vmatpush1.bf16.msra.mxu0 0
    %130 = vmatprep.subr.bf16.mxu0 0
    %131 = vmatpush1.bf16.msra.mxu0 0
    %132 = vmatprep.subr.bf16.mxu0 0
    %133 = vmatpush1.bf16.msra.mxu0 0
    %134 = vmatprep.subr.bf16.mxu0 0
    %135 = vmatpush1.bf16.msra.mxu0 0
    %136 = vmatprep.subr.bf16.mxu0 0
    %137 = vmatpush1.bf16.msra.mxu0 0
    %138 = vmatprep.subr.bf16.mxu0 0
    %139 = vmatpush1.bf16.msra.mxu0 0
    %140 = vmatprep.subr.bf16.mxu0 0
    %141 = vmatpush1.bf16.msra.mxu0 0
    %142 = vmatprep.subr.bf16.mxu0 0
    %143 = vmatpush1.bf16.msra.mxu0 0
    %144 = vmatprep.subr.bf16.mxu0 0
    %145 = vmatpush1.bf16.msra.mxu0 0
    %146 = vmatprep.subr.bf16.mxu0 0
    %147 = vmatpush1.bf16.msra.mxu0 0
    %148 = vmatprep.subr.bf16.mxu0 0
    %149 = vmatpush1.bf16.msra.mxu0 0
    %150 = vmatprep.mubr.bf16.mxu0 0
    %151 = vmatmul.mubr.bf16.gmra.mrb[0].mxu0 %v116
    %v152 = vpop.f32.mrb[0].mxu0
    %v153 = vadd.f32 %v101, %v152
    %v154 = vpop.f32.mrb[0].mxu0
    %v155 = vpop.f32.mrb[0].mxu0
    %v156 = vpop.f32.mrb[0].mxu0
    %157 = vdwg.mxu0
    %v158 = vadd.f32 %v153, 1.0
    %v159 = vlaneseq
    %v160 = vshrl.u32 %v159, 7
    %v161 = vsub.s32 0, %v160
    %v162 = vrot.slane %v158, %v161
    %164 = vrot.lane.b32.xlu0 %v162, 96
    %v165 = vpop.permute.xlu0 %164
    %v167 = vmul.f32 %v92, %v165
    %v168 = vmul.f32 %v93, %v165
    %v169 = vmul.f32 %v94, %v165
    %v170 = vlaneseq
    %v171 = vshrl.u32 %v170, 7
    %v172 = vsub.s32 0, %v171
    %v173 = vrot.slane %v153, %v172
    %v174 = vadd.f32 %v167, %v173
    %v175 = vadd.f32 %v168, %v173
    %v176 = vadd.f32 %v169, %v173
    %v177 = vpack.c.bf16 %v175, %v174
    %v178 = vpack.c.bf16 %v176, %v176
    %v179 = vld [vmem:[%s4] sm:$0xf]
    %v180 = vld [vmem:[%s4 + $0x4] sm:$0xf]
    %v181 = vld [vmem:[%s4 + $0x8] sm:$0xf]
    %v182 = vld [vmem:[%s4 + $0xc] sm:$0xf]
    %v187 = vunpack.c.l.b16 %v179
    %v188 = vunpack.c.l.b16 %v180
    %v189 = vunpack.c.l.b16 %v181
    %v190 = vunpack.c.l.b16 %v182
    %v191 = vpack.c.b16 %v188, %v187
    %v192 = vpack.c.b16 %v190, %v189
    %v196 = vsel %vm114, %v177, 0
    %v199 = vsel %vm114, %v178, 0
    %201 = vmatprep.subr.bf16.mxu0 0
    %202 = vmatpush1.bf16.msra.mxu0 %v191
    %203 = vmatprep.subr.bf16.mxu0 0
    %204 = vmatpush1.bf16.msra.mxu0 %v192
    %205 = vmatprep.subr.bf16.mxu0 0
    %206 = vmatpush1.bf16.msra.mxu0 0
    %207 = vmatprep.subr.bf16.mxu0 0
    %208 = vmatpush1.bf16.msra.mxu0 0
    %209 = vmatprep.subr.bf16.mxu0 0
    %210 = vmatpush1.bf16.msra.mxu0 0
    %211 = vmatprep.subr.bf16.mxu0 0
    %212 = vmatpush1.bf16.msra.mxu0 0
    %213 = vmatprep.subr.bf16.mxu0 0
    %214 = vmatpush1.bf16.msra.mxu0 0
    %215 = vmatprep.subr.bf16.mxu0 0
    %216 = vmatpush1.bf16.msra.mxu0 0
    %217 = vmatprep.subr.bf16.mxu0 0
    %218 = vmatpush1.bf16.msra.mxu0 0
    %219 = vmatprep.subr.bf16.mxu0 0
    %220 = vmatpush1.bf16.msra.mxu0 0
    %221 = vmatprep.subr.bf16.mxu0 0
    %222 = vmatpush1.bf16.msra.mxu0 0
    %223 = vmatprep.subr.bf16.mxu0 0
    %224 = vmatpush1.bf16.msra.mxu0 0
    %225 = vmatprep.subr.bf16.mxu0 0
    %226 = vmatpush1.bf16.msra.mxu0 0
    %227 = vmatprep.subr.bf16.mxu0 0
    %228 = vmatpush1.bf16.msra.mxu0 0
    %229 = vmatprep.subr.bf16.mxu0 0
    %230 = vmatpush1.bf16.msra.mxu0 0
    %231 = vmatprep.subr.bf16.mxu0 0
    %232 = vmatpush1.bf16.msra.mxu0 0
    %233 = vmatprep.mubr.bf16.mxu0 0
    %234 = vmatmul.mubr.bf16.gmra.mrb[0].mxu0 %v196
    %v235 = vpop.f32.mrb[0].mxu0
    %v236 = vadd.f32 0.0, %v235
    %v237 = vpop.f32.mrb[0].mxu0
    %v238 = vpop.f32.mrb[0].mxu0
    %v239 = vadd.f32 0.0, %v238
    %v240 = vpop.f32.mrb[0].mxu0
    %241 = vmatprep.mubr.bf16.mxu0 0
    %242 = vmatmul.mubr.bf16.gmra.mrb[0].mxu0 %v199
    %v243 = vpop.f32.mrb[0].mxu0
    %v244 = vadd.f32 0.0, %v243
    %v245 = vpop.f32.mrb[0].mxu0
    %v246 = vpop.f32.mrb[0].mxu0
    %v247 = vpop.f32.mrb[0].mxu0
    %248 = vdwg.mxu0
    %v249 = vld [vmem:[%s5] sm:$0xf]
    %v250 = vld [vmem:[%s5 + $0x4] sm:$0xf]
    %v251 = vld [vmem:[%s5 + $0x8] sm:$0xf]
    %v252 = vld [vmem:[%s5 + $0xc] sm:$0xf]
    %v257 = vunpack.c.l.b16 %v249
    %v258 = vunpack.c.l.b16 %v250
    %v259 = vunpack.c.l.b16 %v251
    %v260 = vunpack.c.l.b16 %v252
    %v261 = vpack.c.b16 %v258, %v257
    %v262 = vpack.c.b16 %v260, %v259
    %265 = vmatprep.subr.bf16.mxu0 0
    %266 = vmatpush1.bf16.msra.mxu0 %v261
    %267 = vmatprep.subr.bf16.mxu0 0
    %268 = vmatpush1.bf16.msra.mxu0 %v262
    %269 = vmatprep.subr.bf16.mxu0 0
    %270 = vmatpush1.bf16.msra.mxu0 0
    %271 = vmatprep.subr.bf16.mxu0 0
    %272 = vmatpush1.bf16.msra.mxu0 0
    %273 = vmatprep.subr.bf16.mxu0 0
    %274 = vmatpush1.bf16.msra.mxu0 0
    %275 = vmatprep.subr.bf16.mxu0 0
    %276 = vmatpush1.bf16.msra.mxu0 0
    %277 = vmatprep.subr.bf16.mxu0 0
    %278 = vmatpush1.bf16.msra.mxu0 0
    %279 = vmatprep.subr.bf16.mxu0 0
    %280 = vmatpush1.bf16.msra.mxu0 0
    %281 = vmatprep.subr.bf16.mxu0 0
    %282 = vmatpush1.bf16.msra.mxu0 0
    %283 = vmatprep.subr.bf16.mxu0 0
    %284 = vmatpush1.bf16.msra.mxu0 0
    %285 = vmatprep.subr.bf16.mxu0 0
    %286 = vmatpush1.bf16.msra.mxu0 0
    %287 = vmatprep.subr.bf16.mxu0 0
    %288 = vmatpush1.bf16.msra.mxu0 0
    %289 = vmatprep.subr.bf16.mxu0 0
    %290 = vmatpush1.bf16.msra.mxu0 0
    %291 = vmatprep.subr.bf16.mxu0 0
    %292 = vmatpush1.bf16.msra.mxu0 0
    %293 = vmatprep.subr.bf16.mxu0 0
    %294 = vmatpush1.bf16.msra.mxu0 0
    %295 = vmatprep.subr.bf16.mxu0 0
    %296 = vmatpush1.bf16.msra.mxu0 0
    %297 = vmatprep.mubr.bf16.mxu0 0
    %298 = vmatmul.mubr.bf16.gmra.mrb[0].mxu0 %v196
    %v299 = vpop.f32.mrb[0].mxu0
    %v300 = vadd.f32 0.0, %v299
    %v301 = vpop.f32.mrb[0].mxu0
    %v302 = vpop.f32.mrb[0].mxu0
    %v303 = vadd.f32 0.0, %v302
    %v304 = vpop.f32.mrb[0].mxu0
    %305 = vmatprep.mubr.bf16.mxu0 0
    %306 = vmatmul.mubr.bf16.gmra.mrb[0].mxu0 %v199
    %v307 = vpop.f32.mrb[0].mxu0
    %v308 = vadd.f32 0.0, %v307
    %v309 = vpop.f32.mrb[0].mxu0
    %v310 = vpop.f32.mrb[0].mxu0
    %v311 = vpop.f32.mrb[0].mxu0
    %312 = vdwg.mxu0
    %v313 = vld [vmem:[#allocation3] sm:$0xf]
    %v314 = vld [vmem:[#allocation3 + $0x4] sm:$0xf]
    %v315 = vld [vmem:[#allocation3 + $0x8] sm:$0xf]
    %v316 = vld [vmem:[#allocation3 + $0xc] sm:$0xf]
    %v321 = vunpack.c.l.b16 %v313
    %v322 = vunpack.c.l.b16 %v314
    %v323 = vunpack.c.l.b16 %v315
    %v324 = vunpack.c.l.b16 %v316
    %v325 = vpack.c.b16 %v322, %v321
    %v326 = vpack.c.b16 %v324, %v323
    %329 = vmatprep.subr.bf16.mxu0 0
    %330 = vmatpush1.bf16.msra.mxu0 %v325
    %331 = vmatprep.subr.bf16.mxu0 0
    %332 = vmatpush1.bf16.msra.mxu0 %v326
    %333 = vmatprep.subr.bf16.mxu0 0
    %334 = vmatpush1.bf16.msra.mxu0 0
    %335 = vmatprep.subr.bf16.mxu0 0
    %336 = vmatpush1.bf16.msra.mxu0 0
    %337 = vmatprep.subr.bf16.mxu0 0
    %338 = vmatpush1.bf16.msra.mxu0 0
    %339 = vmatprep.subr.bf16.mxu0 0
    %340 = vmatpush1.bf16.msra.mxu0 0
    %341 = vmatprep.subr.bf16.mxu0 0
    %342 = vmatpush1.bf16.msra.mxu0 0
    %343 = vmatprep.subr.bf16.mxu0 0
    %344 = vmatpush1.bf16.msra.mxu0 0
    %345 = vmatprep.subr.bf16.mxu0 0
    %346 = vmatpush1.bf16.msra.mxu0 0
    %347 = vmatprep.subr.bf16.mxu0 0
    %348 = vmatpush1.bf16.msra.mxu0 0
    %349 = vmatprep.subr.bf16.mxu0 0
    %350 = vmatpush1.bf16.msra.mxu0 0
    %351 = vmatprep.subr.bf16.mxu0 0
    %352 = vmatpush1.bf16.msra.mxu0 0
    %353 = vmatprep.subr.bf16.mxu0 0
    %354 = vmatpush1.bf16.msra.mxu0 0
    %355 = vmatprep.subr.bf16.mxu0 0
    %356 = vmatpush1.bf16.msra.mxu0 0
    %357 = vmatprep.subr.bf16.mxu0 0
    %358 = vmatpush1.bf16.msra.mxu0 0
    %359 = vmatprep.subr.bf16.mxu0 0
    %360 = vmatpush1.bf16.msra.mxu0 0
    %361 = vmatprep.mubr.bf16.mxu0 0
    %362 = vmatmul.mubr.bf16.gmra.mrb[0].mxu0 %v196
    %v363 = vpop.f32.mrb[0].mxu0
    %v364 = vadd.f32 0.0, %v363
    %v365 = vpop.f32.mrb[0].mxu0
    %v366 = vpop.f32.mrb[0].mxu0
    %v367 = vadd.f32 0.0, %v366
    %v368 = vpop.f32.mrb[0].mxu0
    %369 = vmatprep.mubr.bf16.mxu0 0
    %370 = vmatmul.mubr.bf16.gmra.mrb[0].mxu0 %v199
    %v371 = vpop.f32.mrb[0].mxu0
    %v372 = vadd.f32 0.0, %v371
    %v373 = vpop.f32.mrb[0].mxu0
    %v374 = vpop.f32.mrb[0].mxu0
    %v375 = vpop.f32.mrb[0].mxu0
    %376 = vdwg.mxu0
    %v377 = vpack.c.bf16 %v239, %v236
    %v378 = vpack.c.bf16 %v244, %v244
    %v379 = vpack.c.bf16 %v303, %v300
    %v380 = vpack.c.bf16 %v308, %v308
    %v382 = vsel %vm114, %v377, 0
    %v385 = vsel %vm114, %v378, 0
    %v388 = vsel %vm114, %v379, 0
    %v391 = vsel %vm114, %v380, 0
    %393 = vmatprep.subr.bf16.mxu0 0
    %394 = vmatpush1.bf16.xpose.msra.mxu0 %v388
    %395 = vmatprep.subr.bf16.mxu0 0
    %396 = vmatpush1.bf16.xpose.msra.mxu0 %v391
    %397 = vmatprep.subr.bf16.mxu0 0
    %398 = vmatpush1.bf16.xpose.msra.mxu0 0
    %399 = vmatprep.subr.bf16.mxu0 0
    %400 = vmatpush1.bf16.xpose.msra.mxu0 0
    %401 = vmatprep.subr.bf16.mxu0 0
    %402 = vmatpush1.bf16.xpose.msra.mxu0 0
    %403 = vmatprep.subr.bf16.mxu0 0
    %404 = vmatpush1.bf16.xpose.msra.mxu0 0
    %405 = vmatprep.subr.bf16.mxu0 0
    %406 = vmatpush1.bf16.xpose.msra.mxu0 0
    %407 = vmatprep.subr.bf16.mxu0 0
    %408 = vmatpush1.bf16.xpose.msra.mxu0 0
    %409 = vmatprep.subr.bf16.mxu0 0
    %410 = vmatpush1.bf16.xpose.msra.mxu0 0
    %411 = vmatprep.subr.bf16.mxu0 0
    %412 = vmatpush1.bf16.xpose.msra.mxu0 0
    %413 = vmatprep.subr.bf16.mxu0 0
    %414 = vmatpush1.bf16.xpose.msra.mxu0 0
    %415 = vmatprep.subr.bf16.mxu0 0
    %416 = vmatpush1.bf16.xpose.msra.mxu0 0
    %417 = vmatprep.subr.bf16.mxu0 0
    %418 = vmatpush1.bf16.xpose.msra.mxu0 0
    %419 = vmatprep.subr.bf16.mxu0 0
    %420 = vmatpush1.bf16.xpose.msra.mxu0 0
    %421 = vmatprep.subr.bf16.mxu0 0
    %422 = vmatpush1.bf16.xpose.msra.mxu0 0
    %423 = vmatprep.subr.bf16.mxu0 0
    %424 = vmatpush1.bf16.xpose.msra.mxu0 0
    %425 = vmatprep.mubr.bf16.mxu0 0
    %426 = vmatmul.mubr.bf16.gmra.mrb[0].mxu0 %v382
    %v427 = vpop.f32.mrb[0].mxu0
    %v428 = vadd.f32 0.0, %v427
    %v429 = vpop.f32.mrb[0].mxu0
    %v430 = vpop.f32.mrb[0].mxu0
    %v431 = vadd.f32 0.0, %v430
    %v432 = vpop.f32.mrb[0].mxu0
    %433 = vmatprep.mubr.bf16.mxu0 0
    %434 = vmatmul.mubr.bf16.gmra.mrb[0].mxu0 %v385
    %v435 = vpop.f32.mrb[0].mxu0
    %v436 = vadd.f32 0.0, %v435
    %v437 = vpop.f32.mrb[0].mxu0
    %v438 = vpop.f32.mrb[0].mxu0
    %v439 = vpop.f32.mrb[0].mxu0
    %440 = vdwg.mxu0
    %v441 = vmul.f32 %v428, 0.17677669
    %v442 = vmul.f32 %v431, 0.17677669
    %v443 = vmul.f32 %v436, 0.17677669
    %vm444 = vcmask 195584
    %v445 = vsel %vm444, %v441, -inf
    %446 = vmax.xlane.f32.xlu0 %v445
    %v447 = vpop.xlane.xlu0 %446
    %v448 = vsel %vm444, %v442, -inf
    %449 = vmax.xlane.f32.xlu0 %v448
    %v450 = vpop.xlane.xlu0 %449
    %v451 = vsel %vm444, %v443, -inf
    %452 = vmax.xlane.f32.xlu0 %v451
    %v453 = vpop.xlane.xlu0 %452
    %v454 = vsub.f32 %v441, %v447
    %v455 = vsub.f32 %v442, %v450
    %v456 = vsub.f32 %v443, %v453
    %v457 = vmul.f32 %v454, 1.442695
    %v458 = vpow.pop %v457
    %v459 = vmul.f32 %v455, 1.442695
    %v460 = vpow.pop %v459
    %v461 = vmul.f32 %v456, 1.442695
    %v462 = vpow.pop %v461
    %v463 = vsel %vm444, %v458, 0.0
    %464 = vadd.xlane.f32.xlu0 %v463
    %v465 = vpop.xlane.xlu0 %464
    %v466 = vsel %vm444, %v460, 0.0
    %467 = vadd.xlane.f32.xlu0 %v466
    %v468 = vpop.xlane.xlu0 %467
    %v469 = vsel %vm444, %v462, 0.0
    %470 = vadd.xlane.f32.xlu0 %v469
    %v471 = vpop.xlane.xlu0 %470
    %v472 = vrcp.pop %v465
    %v473 = vrcp.pop %v468
    %v474 = vrcp.pop %v471
    %v475 = vmul.f32 %v458, %v472
    %v476 = vmul.f32 %v460, %v473
    %v477 = vmul.f32 %v462, %v474
    %v478 = vpack.c.bf16 %v476, %v475
    %v479 = vpack.c.bf16 %v477, %v477
    %v480 = vpack.c.bf16 %v367, %v364
    %v481 = vpack.c.bf16 %v372, %v372
    %v483 = vsel %vm444, %v478, 0
    %v486 = vsel %vm444, %v479, 0
    %vm488 = vcmask 1043456
    %v490 = vsel %vm488, %v481, 0
    %492 = vmatprep.subr.bf16.mxu0 0
    %493 = vmatpush1.bf16.msra.mxu0 %v480
    %494 = vmatprep.subr.bf16.mxu0 0
    %495 = vmatpush1.bf16.msra.mxu0 %v490
    %496 = vmatprep.subr.bf16.mxu0 0
    %497 = vmatpush1.bf16.msra.mxu0 0
    %498 = vmatprep.subr.bf16.mxu0 0
    %499 = vmatpush1.bf16.msra.mxu0 0
    %500 = vmatprep.subr.bf16.mxu0 0
    %501 = vmatpush1.bf16.msra.mxu0 0
    %502 = vmatprep.subr.bf16.mxu0 0
    %503 = vmatpush1.bf16.msra.mxu0 0
    %504 = vmatprep.subr.bf16.mxu0 0
    %505 = vmatpush1.bf16.msra.mxu0 0
    %506 = vmatprep.subr.bf16.mxu0 0
    %507 = vmatpush1.bf16.msra.mxu0 0
    %508 = vmatprep.subr.bf16.mxu0 0
    %509 = vmatpush1.bf16.msra.mxu0 0
    %510 = vmatprep.subr.bf16.mxu0 0
    %511 = vmatpush1.bf16.msra.mxu0 0
    %512 = vmatprep.subr.bf16.mxu0 0
    %513 = vmatpush1.bf16.msra.mxu0 0
    %514 = vmatprep.subr.bf16.mxu0 0
    %515 = vmatpush1.bf16.msra.mxu0 0
    %516 = vmatprep.subr.bf16.mxu0 0
    %517 = vmatpush1.bf16.msra.mxu0 0
    %518 = vmatprep.subr.bf16.mxu0 0
    %519 = vmatpush1.bf16.msra.mxu0 0
    %520 = vmatprep.subr.bf16.mxu0 0
    %521 = vmatpush1.bf16.msra.mxu0 0
    %522 = vmatprep.subr.bf16.mxu0 0
    %523 = vmatpush1.bf16.msra.mxu0 0
    %524 = vmatprep.mubr.bf16.mxu0 0
    %525 = vmatmul.mubr.bf16.gmra.mrb[0].mxu0 %v483
    %v526 = vpop.f32.mrb[0].mxu0
    %v527 = vadd.f32 0.0, %v526
    %v528 = vpop.f32.mrb[0].mxu0
    %v529 = vpop.f32.mrb[0].mxu0
    %v530 = vadd.f32 0.0, %v529
    %v531 = vpop.f32.mrb[0].mxu0
    %532 = vmatprep.mubr.bf16.mxu0 0
    %533 = vmatmul.mubr.bf16.gmra.mrb[0].mxu0 %v486
    %v534 = vpop.f32.mrb[0].mxu0
    %v535 = vadd.f32 0.0, %v534
    %v536 = vpop.f32.mrb[0].mxu0
    %v537 = vpop.f32.mrb[0].mxu0
    %v538 = vpop.f32.mrb[0].mxu0
    %539 = vdwg.mxu0
    %v540 = vpack.c.bf16 %v530, %v527
    %v541 = vpack.c.bf16 %v535, %v535
    %v542 = vld [vmem:[#allocation6] sm:$0xf]
    %v543 = vld [vmem:[#allocation6 + $0x4] sm:$0xf]
    %v544 = vld [vmem:[#allocation6 + $0x8] sm:$0xf]
    %v545 = vld [vmem:[#allocation6 + $0xc] sm:$0xf]
    %v550 = vunpack.c.l.b16 %v542
    %v551 = vunpack.c.l.b16 %v543
    %v552 = vunpack.c.l.b16 %v544
    %v553 = vunpack.c.l.b16 %v545
    %v554 = vpack.c.b16 %v551, %v550
    %v555 = vpack.c.b16 %v553, %v552
    %v559 = vsel %vm114, %v540, 0
    %v562 = vsel %vm114, %v541, 0
    %564 = vmatprep.subr.bf16.mxu0 0
    %565 = vmatpush1.bf16.msra.mxu0 %v554
    %566 = vmatprep.subr.bf16.mxu0 0
    %567 = vmatpush1.bf16.msra.mxu0 %v555
    %568 = vmatprep.subr.bf16.mxu0 0
    %569 = vmatpush1.bf16.msra.mxu0 0
    %570 = vmatprep.subr.bf16.mxu0 0
    %571 = vmatpush1.bf16.msra.mxu0 0
    %572 = vmatprep.subr.bf16.mxu0 0
    %573 = vmatpush1.bf16.msra.mxu0 0
    %574 = vmatprep.subr.bf16.mxu0 0
    %575 = vmatpush1.bf16.msra.mxu0 0
    %576 = vmatprep.subr.bf16.mxu0 0
    %577 = vmatpush1.bf16.msra.mxu0 0
    %578 = vmatprep.subr.bf16.mxu0 0
    %579 = vmatpush1.bf16.msra.mxu0 0
    %580 = vmatprep.subr.bf16.mxu0 0
    %581 = vmatpush1.bf16.msra.mxu0 0
    %582 = vmatprep.subr.bf16.mxu0 0
    %583 = vmatpush1.bf16.msra.mxu0 0
    %584 = vmatprep.subr.bf16.mxu0 0
    %585 = vmatpush1.bf16.msra.mxu0 0
    %586 = vmatprep.subr.bf16.mxu0 0
    %587 = vmatpush1.bf16.msra.mxu0 0
    %588 = vmatprep.subr.bf16.mxu0 0
    %589 = vmatpush1.bf16.msra.mxu0 0
    %590 = vmatprep.subr.bf16.mxu0 0
    %591 = vmatpush1.bf16.msra.mxu0 0
    %592 = vmatprep.subr.bf16.mxu0 0
    %593 = vmatpush1.bf16.msra.mxu0 0
    %594 = vmatprep.subr.bf16.mxu0 0
    %595 = vmatpush1.bf16.msra.mxu0 0
    %596 = vmatprep.mubr.bf16.mxu0 0
    %597 = vmatmul.mubr.bf16.gmra.mrb[0].mxu0 %v559
    %v598 = vpop.f32.mrb[0].mxu0
    %v599 = vadd.f32 0.0, %v598
    %v600 = vpop.f32.mrb[0].mxu0
    %v601 = vpop.f32.mrb[0].mxu0
    %v602 = vadd.f32 0.0, %v601
    %v603 = vpop.f32.mrb[0].mxu0
    %604 = vmatprep.mubr.bf16.mxu0 0
    %605 = vmatmul.mubr.bf16.gmra.mrb[0].mxu0 %v562
    %v606 = vpop.f32.mrb[0].mxu0
    %v607 = vadd.f32 0.0, %v606
    %v608 = vpop.f32.mrb[0].mxu0
    %v609 = vpop.f32.mrb[0].mxu0
    %v610 = vpop.f32.mrb[0].mxu0
    %611 = vdwg.mxu0
    %v612 = vadd.f32 %v92, %v599
    %v613 = vadd.f32 %v93, %v602
    %v614 = vadd.f32 %v94, %v607
    %v615 = vpack.c.bf16 %v613, %v612
    %v616 = vpack.c.bf16 %v614, %v614
    %v617 = vld [vmem:[#allocation8] sm:$0xf]
    %v618 = vld [vmem:[#allocation8 + $0x4] sm:$0xf]
    %v619 = vld [vmem:[#allocation8 + $0x8] sm:$0xf]
    %v620 = vld [vmem:[#allocation8 + $0xc] sm:$0xf]
    %v625 = vunpack.c.l.b16 %v617
    %v626 = vunpack.c.l.b16 %v618
    %v627 = vunpack.c.l.b16 %v619
    %v628 = vunpack.c.l.b16 %v620
    %v629 = vpack.c.b16 %v626, %v625
    %v630 = vpack.c.b16 %v628, %v627
    %v634 = vsel %vm114, %v615, 0
    %v637 = vsel %vm114, %v616, 0
    %639 = vmatprep.subr.bf16.mxu0 0
    %640 = vmatpush1.bf16.msra.mxu0 %v629
    %641 = vmatprep.subr.bf16.mxu0 0
    %642 = vmatpush1.bf16.msra.mxu0 %v630
    %643 = vmatprep.subr.bf16.mxu0 0
    %644 = vmatpush1.bf16.msra.mxu0 0
    %645 = vmatprep.subr.bf16.mxu0 0
    %646 = vmatpush1.bf16.msra.mxu0 0
    %647 = vmatprep.subr.bf16.mxu0 0
    %648 = vmatpush1.bf16.msra.mxu0 0
    %649 = vmatprep.subr.bf16.mxu0 0
    %650 = vmatpush1.bf16.msra.mxu0 0
    %651 = vmatprep.subr.bf16.mxu0 0
    %652 = vmatpush1.bf16.msra.mxu0 0
    %653 = vmatprep.subr.bf16.mxu0 0
    %654 = vmatpush1.bf16.msra.mxu0 0
    %655 = vmatprep.subr.bf16.mxu0 0
    %656 = vmatpush1.bf16.msra.mxu0 0
    %657 = vmatprep.subr.bf16.mxu0 0
    %658 = vmatpush1.bf16.msra.mxu0 0
    %659 = vmatprep.subr.bf16.mxu0 0
    %660 = vmatpush1.bf16.msra.mxu0 0
    %661 = vmatprep.subr.bf16.mxu0 0
    %662 = vmatpush1.bf16.msra.mxu0 0
    %663 = vmatprep.subr.bf16.mxu0 0
    %664 = vmatpush1.bf16.msra.mxu0 0
    %665 = vmatprep.subr.bf16.mxu0 0
    %666 = vmatpush1.bf16.msra.mxu0 0
    %667 = vmatprep.subr.bf16.mxu0 0
    %668 = vmatpush1.bf16.msra.mxu0 0
    %669 = vmatprep.subr.bf16.mxu0 0
    %670 = vmatpush1.bf16.msra.mxu0 0
    %671 = vmatprep.mubr.bf16.mxu0 0
    %672 = vmatmul.mubr.bf16.gmra.mrb[0].mxu0 %v634
    %v673 = vpop.f32.mrb[0].mxu0
    %v674 = vadd.f32 0.0, %v673
    %v675 = vpop.f32.mrb[0].mxu0
    %v676 = vpop.f32.mrb[0].mxu0
    %v677 = vadd.f32 0.0, %v676
    %v678 = vpop.f32.mrb[0].mxu0
    %679 = vmatprep.mubr.bf16.mxu0 0
    %680 = vmatmul.mubr.bf16.gmra.mrb[0].mxu0 %v637
    %v681 = vpop.f32.mrb[0].mxu0
    %v682 = vadd.f32 0.0, %v681
    %v683 = vpop.f32.mrb[0].mxu0
    %v684 = vpop.f32.mrb[0].mxu0
    %v685 = vpop.f32.mrb[0].mxu0
    %686 = vdwg.mxu0
    %v687 = vmul.f32 %v674, %v674
    %v688 = vmul.f32 %v677, %v677
    %v689 = vmul.f32 %v682, %v682
    %v690 = vmul.f32 %v674, %v687
    %v691 = vmul.f32 %v677, %v688
    %v692 = vmul.f32 %v682, %v689
    %v693 = vmul.f32 %v690, 0.044715
    %v694 = vmul.f32 %v691, 0.044715
    %v695 = vmul.f32 %v692, 0.044715
    %v696 = vadd.f32 %v674, %v693
    %v697 = vadd.f32 %v677, %v694
    %v698 = vadd.f32 %v682, %v695
    %v699 = vmul.f32 %v696, 0.7978846
    %v700 = vmul.f32 %v697, 0.7978846
    %v701 = vmul.f32 %v698, 0.7978846
    %v702 = vtanh.pop %v699
    %v703 = vtanh.pop %v700
    %v704 = vtanh.pop %v701
    %v705 = vadd.f32 %v702, 1.0
    %v706 = vadd.f32 %v703, 1.0
    %v707 = vadd.f32 %v704, 1.0
    %v708 = vmul.f32 %v705, 0.5
    %v709 = vmul.f32 %v706, 0.5
    %v710 = vmul.f32 %v707, 0.5
    %v711 = vmul.f32 %v674, %v708
    %v712 = vmul.f32 %v677, %v709
    %v713 = vmul.f32 %v682, %v710
    %v714 = vpack.c.bf16 %v712, %v711
    %v715 = vpack.c.bf16 %v713, %v713
    %v716 = vld [vmem:[%s9] sm:$0xf]
    %v717 = vld [vmem:[%s9 + $0x4] sm:$0xf]
    %v718 = vld [vmem:[%s9 + $0x8] sm:$0xf]
    %v719 = vld [vmem:[%s9 + $0xc] sm:$0xf]
    %v720 = vld [vmem:[%s9 + $0x10] sm:$0xf]
    %v721 = vld [vmem:[%s9 + $0x14] sm:$0xf]
    %v722 = vld [vmem:[%s9 + $0x18] sm:$0xf]
    %v723 = vld [vmem:[%s9 + $0x1c] sm:$0xf]
    %v732 = vunpack.c.l.b16 %v716
    %v733 = vunpack.c.l.b16 %v717
    %v734 = vunpack.c.l.b16 %v718
    %v735 = vunpack.c.l.b16 %v719
    %v736 = vunpack.c.l.b16 %v720
    %v737 = vunpack.c.l.b16 %v721
    %v738 = vunpack.c.l.b16 %v722
    %v739 = vunpack.c.l.b16 %v723
    %v740 = vpack.c.b16 %v733, %v732
    %v741 = vpack.c.b16 %v735, %v734
    %v742 = vpack.c.b16 %v737, %v736
    %v743 = vpack.c.b16 %v739, %v738
    %vm748 = vcmask 523264
    %v750 = vsel %vm748, %v714, 0
    %v753 = vsel %vm748, %v715, 0
    %755 = vmatprep.subr.bf16.mxu0 0
    %756 = vmatpush1.bf16.msra.mxu0 %v740
    %757 = vmatprep.subr.bf16.mxu0 0
    %758 = vmatpush1.bf16.msra.mxu0 %v741
    %759 = vmatprep.subr.bf16.mxu0 0
    %760 = vmatpush1.bf16.msra.mxu0 %v742
    %761 = vmatprep.subr.bf16.mxu0 0
    %762 = vmatpush1.bf16.msra.mxu0 %v743
    %763 = vmatprep.subr.bf16.mxu0 0
    %764 = vmatpush1.bf16.msra.mxu0 0
    %765 = vmatprep.subr.bf16.mxu0 0
    %766 = vmatpush1.bf16.msra.mxu0 0
    %767 = vmatprep.subr.bf16.mxu0 0
    %768 = vmatpush1.bf16.msra.mxu0 0
    %769 = vmatprep.subr.bf16.mxu0 0
    %770 = vmatpush1.bf16.msra.mxu0 0
    %771 = vmatprep.subr.bf16.mxu0 0
    %772 = vmatpush1.bf16.msra.mxu0 0
    %773 = vmatprep.subr.bf16.mxu0 0
    %774 = vmatpush1.bf16.msra.mxu0 0
    %775 = vmatprep.subr.bf16.mxu0 0
    %776 = vmatpush1.bf16.msra.mxu0 0
    %777 = vmatprep.subr.bf16.mxu0 0
    %778 = vmatpush1.bf16.msra.mxu0 0
    %779 = vmatprep.subr.bf16.mxu0 0
    %780 = vmatpush1.bf16.msra.mxu0 0
    %781 = vmatprep.subr.bf16.mxu0 0
    %782 = vmatpush1.bf16.msra.mxu0 0
    %783 = vmatprep.subr.bf16.mxu0 0
    %784 = vmatpush1.bf16.msra.mxu0 0
    %785 = vmatprep.subr.bf16.mxu0 0
    %786 = vmatpush1.bf16.msra.mxu0 0
    %787 = vmatprep.mubr.bf16.mxu0 0
    %788 = vmatmul.mubr.bf16.gmra.mrb[0].mxu0 %v750
    %v789 = vpop.f32.mrb[0].mxu0
    %v790 = vadd.f32 0.0, %v789
    %v791 = vpop.f32.mrb[0].mxu0
    %v792 = vpop.f32.mrb[0].mxu0
    %v793 = vadd.f32 0.0, %v792
    %v794 = vpop.f32.mrb[0].mxu0
    %795 = vmatprep.mubr.bf16.mxu0 0
    %796 = vmatmul.mubr.bf16.gmra.mrb[0].mxu0 %v753
    %v797 = vpop.f32.mrb[0].mxu0
    %v798 = vadd.f32 0.0, %v797
    %v799 = vpop.f32.mrb[0].mxu0
    %v800 = vpop.f32.mrb[0].mxu0
    %v801 = vpop.f32.mrb[0].mxu0
    %802 = vdwg.mxu0
    %v803 = vadd.f32 %v612, %v790
    %v804 = vadd.f32 %v613, %v793
    %v805 = vadd.f32 %v614, %v798
    %806 = vst.msk [vmem:[#allocation2] sm:$0xff] %vm114, %v803
    %807 = vst.msk [vmem:[#allocation2 + $0x8] sm:$0xff] %vm114, %v804
    %808 = vst.msk [vmem:[#allocation2 + $0x10] sm:$0xff] %vm114, %v805
    %v809 = vpack.c.bf16 %v804, %v803
    %v810 = vpack.c.bf16 %v805, %v805
    %v813 = vunpack.c.l.b16 %v809
    %v814 = vunpack.c.h.b16 %v809
    %v815 = vunpack.c.l.b16 %v810
    %v816 = vpack.c.b16 %v813, %v813
    %v817 = vpack.c.b16 %v814, %v814
    %v818 = vpack.c.b16 %v815, %v815
    %vm822 = vcmask 257024
    %823 = vst.msk [vmem:[#allocation9] sm:$0xf] %vm822, %v816
    %824 = vst.msk [vmem:[#allocation9 + $0x4] sm:$0xf] %vm822, %v817
    %825 = vst.msk [vmem:[#allocation9 + $0x8] sm:$0xf] %vm822, %v818
    // Predicated region
    $region58: #{_run_layers_impl.1} parent=1 // pred_check
      _
    $region59: #{_run_layers_impl.1} parent=1 // pred_check_branch
      %827 = sbr.rel (0) target = $region61
    $region60: #{_run_layers_impl.1} parent=1 // pred_region
      %s829 = ssub.s32 192, 192
      %830 = vsyncadd [#allocation5], %s829
      %s831 = sshll.u32 [#allocation9], 4
      %s832 = int_to_ptr.vmem [resolvable:$true] %s831
      %837 = dma.vmem_to_hbm [thread:$0]  %s832, 192, %s10, [#allocation5], 64, 64, 4
    $region61: #{_run_layers_impl.1} parent=1 // pred_fallthru
      _
    // Predicated region
    $region62: #{_run_layers_impl.1} parent=1 // pred_check
      _
    $region63: #{_run_layers_impl.1} parent=1 // pred_check_branch
      %839 = sbr.rel (0) target = $region65
    $region64: #{_run_layers_impl.1} parent=1 // pred_region
      %840 = dma.done [#allocation5], 192
    $region65: #{_run_layers_impl.1} parent=1 // pred_fallthru
      _
    %841 = vsyncpa [#allocation4], 1
    %842 = vsyncpa [#allocation7], 1
    %843 = vsyncpa [#allocation5], 1

</llo_original>
